<compile_context>
chip_gen: v6e
topology: v6e:2x2x1
jax: 0.10.0
libtpu: 0.0.40
codegen_flags: <defaults>
</compile_context>

<pallas_src>
import functools

import jax
import jax.numpy as jnp
from jax.experimental import pallas as pl
from jax.experimental.pallas import tpu as pltpu


def _round_up(v: int, m: int) -> int:
    return ((v + m - 1) // m) * m


def _chip_params():
    """Static, generation-dependent tuning knobs (evaluated outside jit)."""
    try:
        kind = jax.devices()[0].device_kind.lower()
    except Exception:
        kind = ""
    is_v7 = "v7" in kind
    num_tc = 2 if is_v7 else 1                          # TensorCores per chip
    vmem_cap = (48 << 20) if is_v7 else (100 << 20)     # 64 MiB vs 128 MiB physical
    target_step_bytes = (8 << 20) if is_v7 else (4 << 20)  # x+out payload / grid step
    return num_tc, vmem_cap, target_step_bytes


def _vmem_need_bytes(tile_n: int, d: int, x_item: int, w_item: int) -> int:
    # x and out tiles are double-buffered by the pipeline; W / b have constant
    # index_maps (fetched once) but still get a double buffer allocated.
    return (2 * tile_n * d * x_item        # x tiles
            + 2 * tile_n * d * x_item      # out tiles
            + 2 * d * d * w_item           # weight (resident)
            + 2 * 8 * d * 4)               # f32 bias, sublane-padded


def _pick_tile_n(n, d, x_item, w_item, num_tc, target_step_bytes, vmem_cap):
    if n <= 8:
        return n                           # one full block (block dim == array dim)
    per_row = 2 * d * x_item
    t = max(256, min(target_step_bytes // max(per_row, 1), 8192))
    if num_tc > 1:
        # keep >= 2 grid steps per TensorCore so the "parallel" axis can shard
        t = min(t, max(8, _round_up(pl.cdiv(n, 2 * num_tc), 8)))
    t = _round_up(int(t), 8)
    # keep the working set (plus headroom) under the per-generation VMEM cap
    while t > 8 and _vmem_need_bytes(t, d, x_item, w_item) > vmem_cap - (4 << 20):
        t = max(8, _round_up(t // 2, 8))
    if t >= n:
        return n
    return t


def _skip_linear_kernel(x_ref, w_ref, b_ref, o_ref):
    # x: (tile_n, D), w: (D, D) (already (in, out)), b: (1, D) f32.
    # MXU accumulate in f32, add bias + residual in f32, single cast on store.
    x = x_ref[...]
    y = jnp.dot(x, w_ref[...], preferred_element_type=jnp.float32)
    y = y + b_ref[...]
    o_ref[...] = (x.astype(jnp.float32) + y).astype(o_ref.dtype)


@functools.partial(jax.jit, static_argnames=("tile_n", "vmem_limit"))
def _skip_linear_call(x, w, b, *, tile_n: int, vmem_limit: int):
    n, d = x.shape
    b2 = b.astype(jnp.float32).reshape(1, d)   # precast/reshape once, fused by XLA
    grid = (pl.cdiv(n, tile_n),)               # ragged N: last block is masked

    x_item = jnp.dtype(x.dtype).itemsize
    w_item = jnp.dtype(w.dtype).itemsize
    cost = pl.CostEstimate(
        flops=2 * n * d * d,
        transcendentals=0,
        bytes_accessed=x_item * 2 * n * d + w_item * d * d + 4 * d,
    )

    return pl.pallas_call(
        _skip_linear_kernel,
        out_shape=jax.ShapeDtypeStruct((n, d), x.dtype),
        grid_spec=pl.GridSpec(
            grid=grid,
            in_specs=[
                pl.BlockSpec((tile_n, d), lambda i: (i, 0)),   # x: row tiles
                pl.BlockSpec((d, d), lambda i: (0, 0)),        # W: VMEM-resident
                pl.BlockSpec((1, d), lambda i: (0, 0)),        # b: VMEM-resident
            ],
            out_specs=pl.BlockSpec((tile_n, d), lambda i: (i, 0)),
        ),
        compiler_params=pltpu.CompilerParams(
            dimension_semantics=("parallel",),   # row tiles are independent
            vmem_limit_bytes=vmem_limit,
        ),
        cost_estimate=cost,
    )(x, w, b2)


def skip_connection_linear(x, w, b, *, tile_n: int | None = None):
    """SkipConnection(Linear(D, D)): out = x + (x @ w + b).

    `w` is (D_in, D_out) — i.e. the transposed PyTorch Linear weight — and
    `b` is (D_out,).  Works for f32 or bf16 x / w (accumulation stays f32).
    """
    n, d = x.shape
    assert w.shape == (d, d) and b.shape == (d,)

    num_tc, vmem_cap, target_step_bytes = _chip_params()
    x_item = jnp.dtype(x.dtype).itemsize
    w_item = jnp.dtype(w.dtype).itemsize
    if tile_n is None:
        tile_n = _pick_tile_n(n, d, x_item, w_item, num_tc,
                              target_step_bytes, vmem_cap)
    need = _vmem_need_bytes(int(tile_n), d, x_item, w_item)
    vmem_limit = min(vmem_cap, int(need * 1.25) + (2 << 20))

    return _skip_linear_call(x, w, b, tile_n=int(tile_n),
                             vmem_limit=int(vmem_limit))


if __name__ == "__main__":
    key = jax.random.PRNGKey(0)
    k_x, k_w, k_b = jax.random.split(key, 3)

    N, D = 8, 32  # (num_nodes, hidden) — small demo shapes
    x = jax.random.normal(k_x, (N, D), dtype=jnp.float32)

    # Deterministic "Linear(D, D)" params (PyTorch weight shape is (out, in));
    # transpose ONCE here, outside the kernel call / jit.
    w_torch = jax.random.normal(k_w, (D, D), dtype=jnp.float32) * 0.1
    b = jax.random.normal(k_b, (D,), dtype=jnp.float32) * 0.1
    w = w_torch.T  # (D_in, D_out) so the kernel does a plain x @ w

    out = skip_connection_linear(x, w, b)
    out = jax.block_until_ready(out)

    # Reference check (plain JAX): x + module(x)
    ref = x + (x @ w + b)
    assert out.shape == ref.shape, "shape mismatch vs reference"
    assert jnp.allclose(out, ref, atol=1e-5, rtol=1e-5), "mismatch vs reference"

    print("KERNEL_OK")
</pallas_src>

<mosaic_0001>
module attributes {stable_mosaic.version = 11 : i64} {
  func.func @_skip_linear_kernel(%arg0: i32, %arg1: memref<8x32xf32, #tpu.memory_space<vmem>>, %arg2: memref<32x32xf32, #tpu.memory_space<vmem>>, %arg3: memref<1x32xf32, #tpu.memory_space<vmem>>, %arg4: memref<8x32xf32, #tpu.memory_space<vmem>>) attributes {dimension_semantics = [#tpu.dimension_semantics<parallel>], iteration_bounds = array<i64: 1>, scalar_prefetch = 0 : i64, scratch_operands = 0 : i64, tpu.core_type = #tpu.core_type<tc>, window_params = [{transform_indices = @transform_0, window_bounds = array<i64: 8, 32>}, {pipeline_mode = #tpu.pipeline_mode<synchronous>, transform_indices = @transform_1, window_bounds = array<i64: 32, 32>}, {pipeline_mode = #tpu.pipeline_mode<synchronous>, transform_indices = @transform_2, window_bounds = array<i64: 1, 32>}, {transform_indices = @transform_3, window_bounds = array<i64: 8, 32>}]} {
    %c0 = arith.constant 0 : index
    %c0_0 = arith.constant 0 : index
    %0 = vector.load %arg1[%c0, %c0_0] : memref<8x32xf32, #tpu.memory_space<vmem>>, vector<8x32xf32>
    %c0_1 = arith.constant 0 : index
    %c0_2 = arith.constant 0 : index
    %1 = vector.load %arg2[%c0_1, %c0_2] : memref<32x32xf32, #tpu.memory_space<vmem>>, vector<32x32xf32>
    %cst = arith.constant dense<0.000000e+00> : vector<8x32xf32>
    %2 = tpu.matmul %0, %1, %cst {dimension_numbers = #tpu.dot_dimension_numbers<[1], [0], [0], [1], [0, 0, 1, 1], [], []>} : vector<8x32xf32>, vector<32x32xf32>, vector<8x32xf32> -> vector<8x32xf32>
    %c0_3 = arith.constant 0 : index
    %c0_4 = arith.constant 0 : index
    %3 = vector.load %arg3[%c0_3, %c0_4] : memref<1x32xf32, #tpu.memory_space<vmem>>, vector<1x32xf32>
    %4 = vector.broadcast %3 : vector<1x32xf32> to vector<8x32xf32>
    %5 = arith.addf %2, %4 : vector<8x32xf32>
    %6 = arith.addf %0, %5 : vector<8x32xf32>
    %c0_5 = arith.constant 0 : index
    %c0_6 = arith.constant 0 : index
    %7 = vector.load %arg4[%c0_5, %c0_6] : memref<8x32xf32, #tpu.memory_space<vmem>>, vector<8x32xf32>
    tpu.vector_store %arg4[%c0_5, %c0_6], %6 {strides = array<i32>} : memref<8x32xf32, #tpu.memory_space<vmem>>, vector<8x32xf32>,
    return
  }
  func.func @transform_0(%arg0: i32) -> (i32, i32) {
    %c0_i32 = arith.constant 0 : i32
    %c0_i32_0 = arith.constant 0 : i32
    return %arg0, %c0_i32 : i32, i32
  }
  func.func @transform_1(%arg0: i32) -> (i32, i32) {
    %c0_i32 = arith.constant 0 : i32
    %c0_i32_0 = arith.constant 0 : i32
    %c0_i32_1 = arith.constant 0 : i32
    return %c0_i32, %c0_i32_0 : i32, i32
  }
  func.func @transform_2(%arg0: i32) -> (i32, i32) {
    %c0_i32 = arith.constant 0 : i32
    %c0_i32_0 = arith.constant 0 : i32
    %c0_i32_1 = arith.constant 0 : i32
    return %c0_i32, %c0_i32_0 : i32, i32
  }
  func.func @transform_3(%arg0: i32) -> (i32, i32) {
    %c0_i32 = arith.constant 0 : i32
    %c0_i32_0 = arith.constant 0 : i32
    return %arg0, %c0_i32 : i32, i32
  }
}

</mosaic_0001>

<llo_original>
// kernel: _skip_linear_call.1
$region0: #{_skip_linear_call.1}
  #allocation0 [shape = 'u32[]', space=smem, size = 0x4, offset = 0x4, fixed_abs, tag = 'smem constant byte address 0x4 - core index']
  #allocation1 [shape = 'u32[144,128]{1,0:T(1,128)}', space=vmem, size = 0x12000, scoped, tag = 'internal scratch']
  %s0 = inlined_call_operand.hbm [shape: f32[8,32], index: 0, kind: input, shape index: {}]
  %s1 = inlined_call_operand.hbm [shape: f32[32,32], index: 1, kind: input, shape index: {}]
  %s2 = inlined_call_operand.vmem [shape: f32[1,32], index: 2, kind: input, shape index: {}]
  %s3 = inlined_call_operand.hbm [shape: f32[8,32], index: 3, kind: output, shape index: {}]
  %s4 = sld [smem:[#allocation0]]
  $region30: #{_skip_linear_call.1} parent=0
    _
  %s6 = ssub.s32 1, %s4
  %s7 = scalar_select 0, %s6, %s4
  $region1: #{_skip_linear_call.1} parent=0
    #allocation2 [shape = 'u8[4096]{0}', space=vmem, size = 0x1000, scoped, tag = 'input window, operand 0, single buffered']
    #allocation3 [shape = 's32[1]{0}', space=sflag, size = 0x4, scoped, tag = 'scoped memory for _skip_linear_call.1']
    #allocation4 [shape = 's32[1]{0}', space=sflag, size = 0x4, scoped, tag = 'scoped memory for _skip_linear_call.1']
    #allocation5 [shape = 'u8[16384]{0}', space=vmem, size = 0x4000, scoped, tag = 'input window, operand 1, single buffered']
    #allocation6 [shape = 's32[1]{0}', space=sflag, size = 0x4, scoped, tag = 'scoped memory for _skip_linear_call.1']
    #allocation7 [shape = 'u8[4096]{0}', space=vmem, size = 0x1000, scoped, tag = 'output window, operand 0, single buffered']
    %8 = vsyncpa [#allocation3], 0
    %9 = vsyncpa [#allocation6], 0
    %10 = vsyncpa [#allocation4], 0
    // Predicated region
    $region2: #{_skip_linear_call.1} parent=1 // pred_check
      _
    $region3: #{_skip_linear_call.1} parent=1 // pred_check_branch
      %12 = sbr.rel (0) target = $region5
    $region4: #{_skip_linear_call.1} parent=1 // pred_region
      %s14 = ssub.s32 128, 128
      %15 = vsyncadd [#allocation3], %s14
      %s17 = sshll.u32 [#allocation2], 4
      %s18 = int_to_ptr.vmem [resolvable:$true] %s17
      %20 = dma.hbm_to_vmem [thread:$0]  %s0, 128, %s18, [#allocation3]
    $region5: #{_skip_linear_call.1} parent=1 // pred_fallthru
      _
    // Predicated region
    $region6: #{_skip_linear_call.1} parent=1 // pred_check
      _
    $region7: #{_skip_linear_call.1} parent=1 // pred_check_branch
      %22 = sbr.rel (0) target = $region9
    $region8: #{_skip_linear_call.1} parent=1 // pred_region
      %s24 = ssub.s32 512, 512
      %25 = vsyncadd [#allocation6], %s24
      %s26 = sshll.u32 [#allocation5], 4
      %s27 = int_to_ptr.vmem [resolvable:$true] %s26
      %32 = dma.hbm_to_vmem [thread:$0]  %s1, 512, %s27, [#allocation6], 128, 128, 8
    $region9: #{_skip_linear_call.1} parent=1 // pred_fallthru
      _
    // Predicated region
    $region10: #{_skip_linear_call.1} parent=1 // pred_check
      _
    $region11: #{_skip_linear_call.1} parent=1 // pred_check_branch
      %34 = sbr.rel (0) target = $region13
    $region12: #{_skip_linear_call.1} parent=1 // pred_region
      _
    $region13: #{_skip_linear_call.1} parent=1 // pred_fallthru
      _
    // Predicated region
    $region14: #{_skip_linear_call.1} parent=1 // pred_check
      _
    $region15: #{_skip_linear_call.1} parent=1 // pred_check_branch
      %36 = sbr.rel (0) target = $region17
    $region16: #{_skip_linear_call.1} parent=1 // pred_region
      %37 = dma.done [#allocation3], 128
    $region17: #{_skip_linear_call.1} parent=1 // pred_fallthru
      _
    // Predicated region
    $region18: #{_skip_linear_call.1} parent=1 // pred_check
      _
    $region19: #{_skip_linear_call.1} parent=1 // pred_check_branch
      %39 = sbr.rel (0) target = $region21
    $region20: #{_skip_linear_call.1} parent=1 // pred_region
      %40 = dma.done [#allocation6], 512
    $region21: #{_skip_linear_call.1} parent=1 // pred_fallthru
      _
    %v41 = vld [vmem:[#allocation2] sm:$0xff]
    %v42 = vld [vmem:[#allocation5] sm:$0xff]
    %v43 = vld [vmem:[#allocation5 + $0x8] sm:$0xff]
    %v44 = vld [vmem:[#allocation5 + $0x10] sm:$0xff]
    %v45 = vld [vmem:[#allocation5 + $0x18] sm:$0xff]
    %v46 = vld [vmem:[%s2] sm:$0x1]
    %v48 = vlaneseq
    %v49 = vshrl.u32 %v48, 7
    %v50 = vsub.s32 0, %v49
    %v51 = vrot.slane %v46, %v50
    %vm53 = vcmask 261120
    %v55 = vsel %vm53, %v41, 0
    %57 = vmatprep.subr.mxu0 0.0
    %58 = vmatpush1.msra.mxu0 0.0
    %59 = vmatprep.subr.mxu0 0.0
    %60 = vmatpush1.msra.mxu0 0.0
    %61 = vmatprep.subr.mxu0 0.0
    %62 = vmatpush1.msra.mxu0 0.0
    %63 = vmatprep.subr.mxu0 0.0
    %64 = vmatpush1.msra.mxu0 0.0
    %65 = vmatprep.subr.mxu0 0.0
    %66 = vmatpush1.msra.mxu0 0.0
    %67 = vmatprep.subr.mxu0 0.0
    %68 = vmatpush1.msra.mxu0 0.0
    %69 = vmatprep.subr.mxu0 0.0
    %70 = vmatpush1.msra.mxu0 0.0
    %71 = vmatprep.subr.mxu0 0.0
    %72 = vmatpush1.msra.mxu0 0.0
    %73 = vmatprep.subr.mxu0 0.0
    %74 = vmatpush1.msra.mxu0 0.0
    %75 = vmatprep.subr.mxu0 0.0
    %76 = vmatpush1.msra.mxu0 0.0
    %77 = vmatprep.subr.mxu0 0.0
    %78 = vmatpush1.msra.mxu0 0.0
    %79 = vmatprep.subr.mxu0 0.0
    %80 = vmatpush1.msra.mxu0 0.0
    %81 = vmatprep.subr.mxu0 0.0
    %82 = vmatpush1.msra.mxu0 %v45
    %83 = vmatprep.subr.mxu0 0.0
    %84 = vmatpush1.msra.mxu0 %v44
    %85 = vmatprep.subr.mxu0 0.0
    %86 = vmatpush1.msra.mxu0 %v43
    %87 = vmatprep.subr.mxu0 0.0
    %88 = vmatpush1.msra.mxu0 %v42
    %89 = vmatprep.subr.mxu0 0.0
    %90 = vmatpush2.msra.mxu0 0.0
    %91 = vmatprep.subr.mxu0 0.0
    %92 = vmatpush2.msra.mxu0 0.0
    %93 = vmatprep.subr.mxu0 0.0
    %94 = vmatpush2.msra.mxu0 0.0
    %95 = vmatprep.subr.mxu0 0.0
    %96 = vmatpush2.msra.mxu0 0.0
    %97 = vmatprep.subr.mxu0 0.0
    %98 = vmatpush2.msra.mxu0 0.0
    %99 = vmatprep.subr.mxu0 0.0
    %100 = vmatpush2.msra.mxu0 0.0
    %101 = vmatprep.subr.mxu0 0.0
    %102 = vmatpush2.msra.mxu0 0.0
    %103 = vmatprep.subr.mxu0 0.0
    %104 = vmatpush2.msra.mxu0 0.0
    %105 = vmatprep.subr.mxu0 0.0
    %106 = vmatpush2.msra.mxu0 0.0
    %107 = vmatprep.subr.mxu0 0.0
    %108 = vmatpush2.msra.mxu0 0.0
    %109 = vmatprep.subr.mxu0 0.0
    %110 = vmatpush2.msra.mxu0 0.0
    %111 = vmatprep.subr.mxu0 0.0
    %112 = vmatpush2.msra.mxu0 0.0
    %113 = vmatprep.subr.mxu0 0.0
    %114 = vmatpush2.msra.mxu0 0.0
    %115 = vmatprep.subr.mxu0 0.0
    %116 = vmatpush2.msra.mxu0 0.0
    %117 = vmatprep.subr.mxu0 0.0
    %118 = vmatpush2.msra.mxu0 0.0
    %119 = vmatprep.subr.mxu0 0.0
    %120 = vmatpush2.msra.mxu0 0.0
    %121 = vmatprep.mubr.f32.mxu0 0.0
    %122 = vmatmul.mubr.f32.gmra.mxu0 %v55
    %v123 = vpop.f32.mrf.mxu0
    %v124 = vadd.f32 %v51, %v123
    %v125 = vpop.f32.mrf.mxu0
    %126 = vdwg.mxu0
    %v127 = vadd.f32 %v41, %v124
    %128 = vst.msk [vmem:[#allocation7] sm:$0xff] %vm53, %v127
    // Predicated region
    $region22: #{_skip_linear_call.1} parent=1 // pred_check
      _
    $region23: #{_skip_linear_call.1} parent=1 // pred_check_branch
      %130 = sbr.rel (0) target = $region25
    $region24: #{_skip_linear_call.1} parent=1 // pred_region
      %s132 = ssub.s32 128, 128
      %133 = vsyncadd [#allocation4], %s132
      %s135 = sshll.u32 [#allocation7], 4
      %s136 = int_to_ptr.vmem [resolvable:$true] %s135
      %138 = dma.vmem_to_hbm [thread:$0]  %s136, 128, %s3, [#allocation4]
    $region25: #{_skip_linear_call.1} parent=1 // pred_fallthru
      _
    // Predicated region
    $region26: #{_skip_linear_call.1} parent=1 // pred_check
      _
    $region27: #{_skip_linear_call.1} parent=1 // pred_check_branch
      %140 = sbr.rel (0) target = $region29
    $region28: #{_skip_linear_call.1} parent=1 // pred_region
      %141 = dma.done [#allocation4], 128
    $region29: #{_skip_linear_call.1} parent=1 // pred_fallthru
      _
    %142 = vsyncpa [#allocation3], 1
    %143 = vsyncpa [#allocation6], 1
    %144 = vsyncpa [#allocation4], 1

</llo_original>
